<compile_context>
chip_gen: v7x
topology: tpu7x:2x2x1
jax: 0.10.0
libtpu: 0.0.40
codegen_flags: <defaults>
</compile_context>

<pallas_src>
import functools

import jax
import jax.numpy as jnp
from jax.experimental import pallas as pl
from jax.experimental.pallas import tpu as pltpu


def _round_up(x, m):
    return (x + m - 1) // m * m


# -----------------------------------------------------------------------------
# Pallas kernel: one MXU pass per (tm, N) output tile, f32 accumulation,
# bias added in f32, cast to output dtype on store.
# -----------------------------------------------------------------------------
def _patch_proj_kernel(p_ref, w_ref, b_ref, o_ref):
    acc = jnp.dot(p_ref[...], w_ref[...], preferred_element_type=jnp.float32)
    o_ref[...] = (acc + b_ref[...]).astype(o_ref.dtype)


def _patch_proj(patches, weight_kn, bias_1n, *, tm, out_dtype, input_fusion):
    M, K = patches.shape
    Kw, N = weight_kn.shape
    assert K == Kw and bias_1n.shape == (1, N)

    grid = (pl.cdiv(M, tm),)  # ragged last block is masked by Pallas

    cost = pl.CostEstimate(
        flops=2 * M * K * N,
        transcendentals=0,
        bytes_accessed=(
            patches.size * patches.dtype.itemsize
            + weight_kn.size * weight_kn.dtype.itemsize
            + bias_1n.size * bias_1n.dtype.itemsize
            + M * N * jnp.dtype(out_dtype).itemsize
        ),
    )

    cp_kwargs = dict(dimension_semantics=("parallel",))
    if input_fusion:
        # Allow XLA to fuse the patchify transpose / bf16 cast that produces
        # `patches` into the kernel's input DMA (no HBM materialization of P).
        cp_kwargs["allow_input_fusion"] = [True, False, False]

    return pl.pallas_call(
        _patch_proj_kernel,
        out_shape=jax.ShapeDtypeStruct((M, N), out_dtype),
        grid_spec=pltpu.PrefetchScalarGridSpec(
            num_scalar_prefetch=0,
            grid=grid,
            in_specs=[
                pl.BlockSpec((tm, K), lambda i: (i, 0)),   # P tile (full-K block)
                pl.BlockSpec((K, N), lambda i: (0, 0)),    # weight: constant -> resident
                pl.BlockSpec((1, N), lambda i: (0, 0)),    # bias: constant -> resident
            ],
            out_specs=pl.BlockSpec((tm, N), lambda i: (i, 0)),
        ),
        compiler_params=pltpu.CompilerParams(**cp_kwargs),
        cost_estimate=cost,
    )(patches, weight_kn, bias_1n)


class PatchEmbedPallas:
    """JAX/Pallas equivalent of the PyTorch PatchEmbed module (norm = Identity)."""

    def __init__(
        self,
        img_size=16,
        patch_size=8,
        num_frames=2,
        tubelet_size=2,
        in_chans=4,
        embed_dim=128,
        flatten=True,
        bias=True,
        compute_dtype=jnp.bfloat16,   # bf16 P/W streams by default (f32 accumulation)
        input_fusion=True,            # try to fuse patchify into the kernel input DMA
        key=None,
    ):
        self.img_size = (img_size, img_size)
        self.patch_size = (patch_size, patch_size)
        self.num_frames = num_frames
        self.tubelet_size = tubelet_size
        self.in_chans = in_chans
        self.embed_dim = embed_dim
        self.flatten = flatten
        self.compute_dtype = compute_dtype
        self.grid_size = (
            num_frames // tubelet_size,
            self.img_size[0] // self.patch_size[0],
            self.img_size[1] // self.patch_size[1],
        )
        self.num_patches = self.grid_size[0] * self.grid_size[1] * self.grid_size[2]

        key = jax.random.PRNGKey(42) if key is None else key
        kw, kb = jax.random.split(key)
        # Conv3d weight: (embed_dim, in_chans, tubelet, ph, pw); bias: (embed_dim,)
        self.K = in_chans * tubelet_size * patch_size * patch_size
        bound = 1.0 / (self.K ** 0.5)
        self.weight = jax.random.uniform(
            kw, (embed_dim, in_chans, tubelet_size, patch_size, patch_size),
            dtype=jnp.float32, minval=-bound, maxval=bound,
        )
        self.bias = (
            jax.random.uniform(kb, (embed_dim,), dtype=jnp.float32,
                               minval=-bound, maxval=bound)
            if bias else jnp.zeros((embed_dim,), jnp.float32)
        )

        # Projection matrix pre-transposed ONCE to (K, E); cast once to compute dtype.
        w_kn = self.weight.reshape(embed_dim, self.K).T
        self._w_kn = w_kn.astype(compute_dtype) if compute_dtype is not None else w_kn
        self._b_1n = self.bias.reshape(1, embed_dim)            # bias stays f32

        # Two jitted forwards (with / without input fusion); fall back automatically
        # if the fused variant fails to compile on this generation.
        self._use_input_fusion = bool(input_fusion)
        self._fwd_fused = jax.jit(functools.partial(self._forward_impl, input_fusion=True))
        self._fwd_plain = jax.jit(functools.partial(self._forward_impl, input_fusion=False))

    # ------------------------------------------------------------------ helpers
    def _pick_tm(self, M, K, N, p_itemsize, out_itemsize):
        sub = 16 if p_itemsize < 4 else 8          # bf16 packs 16 rows per sublane group
        if M <= 2 * sub:
            return M                               # single block == full array (legal)
        # VMEM budget: double-buffered P + OUT blocks <= ~8 MiB (safe on every gen's
        # default scoped-VMEM limit; weight/bias slabs are small and resident).
        per_row = K * p_itemsize + N * out_itemsize
        budget_rows = max(sub, ((8 << 20) // (2 * per_row)) // sub * sub)
        # Cap at ceil(M/2) so the 1-D "parallel" grid has >=2 steps (v7x megacore),
        # and at 1024 rows (big enough to amortize per-step overhead everywhere).
        tm = min(1024, budget_rows, _round_up(pl.cdiv(M, 2), sub))
        return max(sub, tm)

    def _forward_impl(self, x, *, input_fusion):
        # x: (B, C, T, H, W)  -- PyTorch NCTHW layout
        B, C, T, H, W = x.shape
        tt = self.tubelet_size
        ph, pw = self.patch_size
        gt, gh, gw = T // tt, H // ph, W // pw
        L = gt * gh * gw
        K = C * tt * ph * pw
        assert K == self.K

        # Patchify rearrange (fused into the kernel input DMA when possible).
        p = x.reshape(B, C, gt, tt, gh, ph, gw, pw)
        p = p.transpose(0, 2, 4, 6, 1, 3, 5, 7)      # (B, gt, gh, gw, C, tt, ph, pw)
        p = p.reshape(B * L, K)
        if self.compute_dtype is not None:
            p = p.astype(self.compute_dtype)

        M = B * L
        out_dtype = x.dtype
        tm = self._pick_tm(M, K, self.embed_dim, p.dtype.itemsize,
                           jnp.dtype(out_dtype).itemsize)

        out = _patch_proj(p, self._w_kn, self._b_1n, tm=tm,
                          out_dtype=out_dtype, input_fusion=input_fusion)  # (M, E)
        out = out.reshape(B, L, self.embed_dim)
        if not self.flatten:
            out = out.reshape(B, gt, gh, gw, self.embed_dim).transpose(0, 4, 1, 2, 3)
        # norm_layer defaults to None (Identity); nothing further to emit.
        return out

    def __call__(self, x):
        if self._use_input_fusion:
            try:
                return self._fwd_fused(x)
            except Exception:
                # XLA/Mosaic rejected fusing the patchify producer into the
                # kernel input; fall back permanently to the unfused path.
                self._use_input_fusion = False
        return self._fwd_plain(x)


# -----------------------------------------------------------------------------
# Pure-JAX reference: Conv3d with stride == kernel via conv_general_dilated.
# -----------------------------------------------------------------------------
def _reference(x, weight, bias, tubelet, patch):
    out = jax.lax.conv_general_dilated(
        x, weight,
        window_strides=(tubelet, patch, patch),
        padding="VALID",
        dimension_numbers=("NCTHW", "OITHW", "NCTHW"),
    )
    out = out + bias.reshape(1, -1, 1, 1, 1)
    B, E = out.shape[0], out.shape[1]
    return out.reshape(B, E, -1).transpose(0, 2, 1)  # (B, L, E)


if __name__ == "__main__":
    B, C, T, H, W = 2, 4, 2, 16, 16
    x = jax.random.normal(jax.random.PRNGKey(0), (B, C, T, H, W), dtype=jnp.float32)

    # Case 1: default path (bf16 compute streams, f32 accumulation).
    mod = PatchEmbedPallas(img_size=16, patch_size=8, num_frames=T, tubelet_size=2,
                           in_chans=C, embed_dim=128)
    out = jax.block_until_ready(mod(x))
    ref = _reference(x, mod.weight, mod.bias, mod.tubelet_size, mod.patch_size[0])
    assert out.shape == (B, mod.num_patches, 128), out.shape
    assert jnp.allclose(out, ref, atol=3e-2, rtol=3e-2), float(jnp.max(jnp.abs(out - ref)))

    # Case 2: f32 compute path, tight tolerance against the conv reference.
    mod32 = PatchEmbedPallas(img_size=16, patch_size=8, num_frames=T, tubelet_size=2,
                             in_chans=C, embed_dim=128, compute_dtype=None,
                             key=jax.random.PRNGKey(3))
    out32 = jax.block_until_ready(mod32(x))
    ref32 = _reference(x, mod32.weight, mod32.bias, 2, 8)
    assert jnp.allclose(out32, ref32, atol=1e-4, rtol=1e-4), float(
        jnp.max(jnp.abs(out32 - ref32)))

    # Case 3: non-128-multiple embed_dim (192) and in_chans=3 — exercises the
    # full-dim (un-padded) lane block and masked output stores.
    mod192 = PatchEmbedPallas(img_size=16, patch_size=8, num_frames=2, tubelet_size=2,
                              in_chans=3, embed_dim=192, compute_dtype=None,
                              key=jax.random.PRNGKey(7))
    x2 = jax.random.normal(jax.random.PRNGKey(1), (2, 3, 2, 16, 16), dtype=jnp.float32)
    out192 = jax.block_until_ready(mod192(x2))
    ref192 = _reference(x2, mod192.weight, mod192.bias, 2, 8)
    assert out192.shape == (2, mod192.num_patches, 192), out192.shape
    assert jnp.allclose(out192, ref192, atol=1e-4, rtol=1e-4), float(
        jnp.max(jnp.abs(out192 - ref192)))

    print("KERNEL_OK")
</pallas_src>

<mosaic_0001>
module attributes {stable_mosaic.version = 11 : i64} {
  func.func @_patch_proj_kernel(%arg0: i32, %arg1: memref<8x512xbf16, #tpu.memory_space<vmem>>, %arg2: memref<512x128xbf16, #tpu.memory_space<vmem>>, %arg3: memref<1x128xf32, #tpu.memory_space<vmem>>, %arg4: memref<8x128xf32, #tpu.memory_space<vmem>>) attributes {dimension_semantics = [#tpu.dimension_semantics<parallel>], iteration_bounds = array<i64: 1>, scalar_prefetch = 0 : i64, scratch_operands = 0 : i64, tpu.core_type = #tpu.core_type<tc>, window_params = [{transform_indices = @transform_0, window_bounds = array<i64: 8, 512>}, {pipeline_mode = #tpu.pipeline_mode<synchronous>, transform_indices = @transform_1, window_bounds = array<i64: 512, 128>}, {pipeline_mode = #tpu.pipeline_mode<synchronous>, transform_indices = @transform_2, window_bounds = array<i64: 1, 128>}, {transform_indices = @transform_3, window_bounds = array<i64: 8, 128>}]} {
    %c0 = arith.constant 0 : index
    %c0_0 = arith.constant 0 : index
    %0 = vector.load %arg1[%c0, %c0_0] : memref<8x512xbf16, #tpu.memory_space<vmem>>, vector<8x512xbf16>
    %c0_1 = arith.constant 0 : index
    %c0_2 = arith.constant 0 : index
    %1 = vector.load %arg2[%c0_1, %c0_2] : memref<512x128xbf16, #tpu.memory_space<vmem>>, vector<512x128xbf16>
    %cst = arith.constant dense<0.000000e+00> : vector<8x128xf32>
    %2 = tpu.matmul %0, %1, %cst {dimension_numbers = #tpu.dot_dimension_numbers<[1], [0], [0], [1], [0, 0, 1, 1], [], []>} : vector<8x512xbf16>, vector<512x128xbf16>, vector<8x128xf32> -> vector<8x128xf32>
    %c0_3 = arith.constant 0 : index
    %c0_4 = arith.constant 0 : index
    %3 = vector.load %arg3[%c0_3, %c0_4] : memref<1x128xf32, #tpu.memory_space<vmem>>, vector<1x128xf32>
    %4 = vector.broadcast %3 : vector<1x128xf32> to vector<8x128xf32>
    %5 = arith.addf %2, %4 : vector<8x128xf32>
    %c0_5 = arith.constant 0 : index
    %c0_6 = arith.constant 0 : index
    %6 = vector.load %arg4[%c0_5, %c0_6] : memref<8x128xf32, #tpu.memory_space<vmem>>, vector<8x128xf32>
    tpu.vector_store %arg4[%c0_5, %c0_6], %5 {strides = array<i32>} : memref<8x128xf32, #tpu.memory_space<vmem>>, vector<8x128xf32>,
    return
  }
  func.func @transform_0(%arg0: i32) -> (i32, i32) {
    %c0_i32 = arith.constant 0 : i32
    %c0_i32_0 = arith.constant 0 : i32
    return %arg0, %c0_i32 : i32, i32
  }
  func.func @transform_1(%arg0: i32) -> (i32, i32) {
    %c0_i32 = arith.constant 0 : i32
    %c0_i32_0 = arith.constant 0 : i32
    %c0_i32_1 = arith.constant 0 : i32
    return %c0_i32, %c0_i32_0 : i32, i32
  }
  func.func @transform_2(%arg0: i32) -> (i32, i32) {
    %c0_i32 = arith.constant 0 : i32
    %c0_i32_0 = arith.constant 0 : i32
    %c0_i32_1 = arith.constant 0 : i32
    return %c0_i32, %c0_i32_0 : i32, i32
  }
  func.func @transform_3(%arg0: i32) -> (i32, i32) {
    %c0_i32 = arith.constant 0 : i32
    %c0_i32_0 = arith.constant 0 : i32
    return %arg0, %c0_i32 : i32, i32
  }
}

module attributes {stable_mosaic.version = 11 : i64} {
  func.func @_patch_proj_kernel(%arg0: i32, %arg1: memref<8x512xbf16, #tpu.memory_space<vmem>>, %arg2: memref<512x128xbf16, #tpu.memory_space<vmem>>, %arg3: memref<1x128xf32, #tpu.memory_space<vmem>>, %arg4: memref<8x128xf32, #tpu.memory_space<vmem>>) attributes {dimension_semantics = [#tpu.dimension_semantics<parallel>], iteration_bounds = array<i64: 1>, scalar_prefetch = 0 : i64, scratch_operands = 0 : i64, tpu.core_type = #tpu.core_type<tc>, window_params = [{transform_indices = @transform_0, window_bounds = array<i64: 8, 512>}, {pipeline_mode = #tpu.pipeline_mode<synchronous>, transform_indices = @transform_1, window_bounds = array<i64: 512, 128>}, {pipeline_mode = #tpu.pipeline_mode<synchronous>, transform_indices = @transform_2, window_bounds = array<i64: 1, 128>}, {transform_indices = @transform_3, window_bounds = array<i64: 8, 128>}]} {
    %c0 = arith.constant 0 : index
    %c0_0 = arith.constant 0 : index
    %0 = vector.load %arg1[%c0, %c0_0] : memref<8x512xbf16, #tpu.memory_space<vmem>>, vector<8x512xbf16>
    %c0_1 = arith.constant 0 : index
    %c0_2 = arith.constant 0 : index
    %1 = vector.load %arg2[%c0_1, %c0_2] : memref<512x128xbf16, #tpu.memory_space<vmem>>, vector<512x128xbf16>
    %cst = arith.constant dense<0.000000e+00> : vector<8x128xf32>
    %2 = tpu.matmul %0, %1, %cst {dimension_numbers = #tpu.dot_dimension_numbers<[1], [0], [0], [1], [0, 0, 1, 1], [], []>} : vector<8x512xbf16>, vector<512x128xbf16>, vector<8x128xf32> -> vector<8x128xf32>
    %c0_3 = arith.constant 0 : index
    %c0_4 = arith.constant 0 : index
    %3 = vector.load %arg3[%c0_3, %c0_4] : memref<1x128xf32, #tpu.memory_space<vmem>>, vector<1x128xf32>
    %4 = vector.broadcast %3 : vector<1x128xf32> to vector<8x128xf32>
    %5 = arith.addf %2, %4 : vector<8x128xf32>
    %c0_5 = arith.constant 0 : index
    %c0_6 = arith.constant 0 : index
    %6 = vector.load %arg4[%c0_5, %c0_6] : memref<8x128xf32, #tpu.memory_space<vmem>>, vector<8x128xf32>
    tpu.vector_store %arg4[%c0_5, %c0_6], %5 {strides = array<i32>} : memref<8x128xf32, #tpu.memory_space<vmem>>, vector<8x128xf32>,
    return
  }
  func.func @transform_0(%arg0: i32) -> (i32, i32) {
    %c0_i32 = arith.constant 0 : i32
    %c0_i32_0 = arith.constant 0 : i32
    return %arg0, %c0_i32 : i32, i32
  }
  func.func @transform_1(%arg0: i32) -> (i32, i32) {
    %c0_i32 = arith.constant 0 : i32
    %c0_i32_0 = arith.constant 0 : i32
    %c0_i32_1 = arith.constant 0 : i32
    return %c0_i32, %c0_i32_0 : i32, i32
  }
  func.func @transform_2(%arg0: i32) -> (i32, i32) {
    %c0_i32 = arith.constant 0 : i32
    %c0_i32_0 = arith.constant 0 : i32
    %c0_i32_1 = arith.constant 0 : i32
    return %c0_i32, %c0_i32_0 : i32, i32
  }
  func.func @transform_3(%arg0: i32) -> (i32, i32) {
    %c0_i32 = arith.constant 0 : i32
    %c0_i32_0 = arith.constant 0 : i32
    return %arg0, %c0_i32 : i32, i32
  }
}

</mosaic_0001>

<llo_original>
// kernel: _forward_impl.1
$region0: #{_forward_impl.1}
  #allocation0 [shape = 'u32[]', space=smem, size = 0x4, offset = 0x4, fixed_abs, tag = 'smem constant byte address 0x4 - core index']
  #allocation1 [shape = 'u32[144,128]{1,0:T(1,128)}', space=vmem, size = 0x12000, scoped, tag = 'internal scratch']
  %s0 = inlined_call_operand.vmem [shape: bf16[8,512], index: 0, kind: input, shape index: {}]
  %s1 = inlined_call_operand.vmem [shape: bf16[512,128], index: 1, kind: input, shape index: {}]
  %s2 = inlined_call_operand.vmem [shape: f32[1,128], index: 2, kind: input, shape index: {}]
  %s3 = inlined_call_operand.hbm [shape: f32[8,128], index: 3, kind: output, shape index: {}]
  %s4 = sld [smem:[#allocation0]]
  $region22: #{_forward_impl.1} parent=0
    _
  %s6 = ssub.s32 1, %s4
  %s7 = scalar_select 0, %s6, %s4
  $region1: #{_forward_impl.1} parent=0
    #allocation2 [shape = 'u8[4096]{0}', space=vmem, size = 0x1000, scoped, tag = 'output window, operand 0, single buffered']
    #allocation3 [shape = 's32[1]{0}', space=sflag, size = 0x4, scoped, tag = 'scoped memory for _forward_impl.1']
    %8 = vsyncpa [#allocation3], 0
    // Predicated region
    $region2: #{_forward_impl.1} parent=1 // pred_check
      _
    $region3: #{_forward_impl.1} parent=1 // pred_check_branch
      %10 = sbr.rel (0) target = $region5
    $region4: #{_forward_impl.1} parent=1 // pred_region
      _
    $region5: #{_forward_impl.1} parent=1 // pred_fallthru
      _
    // Predicated region
    $region6: #{_forward_impl.1} parent=1 // pred_check
      _
    $region7: #{_forward_impl.1} parent=1 // pred_check_branch
      %12 = sbr.rel (0) target = $region9
    $region8: #{_forward_impl.1} parent=1 // pred_region
      _
    $region9: #{_forward_impl.1} parent=1 // pred_fallthru
      _
    // Predicated region
    $region10: #{_forward_impl.1} parent=1 // pred_check
      _
    $region11: #{_forward_impl.1} parent=1 // pred_check_branch
      %14 = sbr.rel (0) target = $region13
    $region12: #{_forward_impl.1} parent=1 // pred_region
      _
    $region13: #{_forward_impl.1} parent=1 // pred_fallthru
      _
    %v16 = vld [vmem:[%s0] sm:$0xff]
    %v17 = vld [vmem:[%s0 + $0x8] sm:$0xff]
    %v18 = vld [vmem:[%s1] sm:$0xf]
    %v19 = vld [vmem:[%s1 + $0x4] sm:$0xf]
    %v20 = vld [vmem:[%s1 + $0x8] sm:$0xf]
    %v21 = vld [vmem:[%s1 + $0xc] sm:$0xf]
    %v22 = vld [vmem:[%s1 + $0x10] sm:$0xf]
    %v23 = vld [vmem:[%s1 + $0x14] sm:$0xf]
    %v24 = vld [vmem:[%s1 + $0x18] sm:$0xf]
    %v25 = vld [vmem:[%s1 + $0x1c] sm:$0xf]
    %v26 = vld [vmem:[%s1 + $0x20] sm:$0xf]
    %v27 = vld [vmem:[%s1 + $0x24] sm:$0xf]
    %v28 = vld [vmem:[%s1 + $0x28] sm:$0xf]
    %v29 = vld [vmem:[%s1 + $0x2c] sm:$0xf]
    %v30 = vld [vmem:[%s1 + $0x30] sm:$0xf]
    %v31 = vld [vmem:[%s1 + $0x34] sm:$0xf]
    %v32 = vld [vmem:[%s1 + $0x38] sm:$0xf]
    %v33 = vld [vmem:[%s1 + $0x3c] sm:$0xf]
    %v34 = vld [vmem:[%s1 + $0x40] sm:$0xf]
    %v35 = vld [vmem:[%s1 + $0x44] sm:$0xf]
    %v36 = vld [vmem:[%s1 + $0x48] sm:$0xf]
    %v37 = vld [vmem:[%s1 + $0x4c] sm:$0xf]
    %v38 = vld [vmem:[%s1 + $0x50] sm:$0xf]
    %v39 = vld [vmem:[%s1 + $0x54] sm:$0xf]
    %v40 = vld [vmem:[%s1 + $0x58] sm:$0xf]
    %v41 = vld [vmem:[%s1 + $0x5c] sm:$0xf]
    %v42 = vld [vmem:[%s1 + $0x60] sm:$0xf]
    %v43 = vld [vmem:[%s1 + $0x64] sm:$0xf]
    %v44 = vld [vmem:[%s1 + $0x68] sm:$0xf]
    %v45 = vld [vmem:[%s1 + $0x6c] sm:$0xf]
    %v46 = vld [vmem:[%s1 + $0x70] sm:$0xf]
    %v47 = vld [vmem:[%s1 + $0x74] sm:$0xf]
    %v48 = vld [vmem:[%s1 + $0x78] sm:$0xf]
    %v49 = vld [vmem:[%s1 + $0x7c] sm:$0xf]
    %v50 = vld [vmem:[%s1 + $0x80] sm:$0xf]
    %v51 = vld [vmem:[%s1 + $0x84] sm:$0xf]
    %v52 = vld [vmem:[%s1 + $0x88] sm:$0xf]
    %v53 = vld [vmem:[%s1 + $0x8c] sm:$0xf]
    %v54 = vld [vmem:[%s1 + $0x90] sm:$0xf]
    %v55 = vld [vmem:[%s1 + $0x94] sm:$0xf]
    %v56 = vld [vmem:[%s1 + $0x98] sm:$0xf]
    %v57 = vld [vmem:[%s1 + $0x9c] sm:$0xf]
    %v58 = vld [vmem:[%s1 + $0xa0] sm:$0xf]
    %v59 = vld [vmem:[%s1 + $0xa4] sm:$0xf]
    %v60 = vld [vmem:[%s1 + $0xa8] sm:$0xf]
    %v61 = vld [vmem:[%s1 + $0xac] sm:$0xf]
    %v62 = vld [vmem:[%s1 + $0xb0] sm:$0xf]
    %v63 = vld [vmem:[%s1 + $0xb4] sm:$0xf]
    %v64 = vld [vmem:[%s1 + $0xb8] sm:$0xf]
    %v65 = vld [vmem:[%s1 + $0xbc] sm:$0xf]
    %v66 = vld [vmem:[%s1 + $0xc0] sm:$0xf]
    %v67 = vld [vmem:[%s1 + $0xc4] sm:$0xf]
    %v68 = vld [vmem:[%s1 + $0xc8] sm:$0xf]
    %v69 = vld [vmem:[%s1 + $0xcc] sm:$0xf]
    %v70 = vld [vmem:[%s1 + $0xd0] sm:$0xf]
    %v71 = vld [vmem:[%s1 + $0xd4] sm:$0xf]
    %v72 = vld [vmem:[%s1 + $0xd8] sm:$0xf]
    %v73 = vld [vmem:[%s1 + $0xdc] sm:$0xf]
    %v74 = vld [vmem:[%s1 + $0xe0] sm:$0xf]
    %v75 = vld [vmem:[%s1 + $0xe4] sm:$0xf]
    %v76 = vld [vmem:[%s1 + $0xe8] sm:$0xf]
    %v77 = vld [vmem:[%s1 + $0xec] sm:$0xf]
    %v78 = vld [vmem:[%s1 + $0xf0] sm:$0xf]
    %v79 = vld [vmem:[%s1 + $0xf4] sm:$0xf]
    %v80 = vld [vmem:[%s1 + $0xf8] sm:$0xf]
    %v81 = vld [vmem:[%s1 + $0xfc] sm:$0xf]
    %v82 = vld [vmem:[%s2] sm:$0x1]
    %v84 = vlaneseq
    %v85 = vshrl.u32 %v84, 7
    %v86 = vsub.s32 0, %v85
    %v87 = vrot.slane %v82, %v86
    %v91 = vunpack.c.l.b16 %v16
    %v92 = vunpack.c.h.b16 %v16
    %v93 = vunpack.c.l.b16 %v17
    %v94 = vunpack.c.h.b16 %v17
    %v95 = vpack.c.b16 %v91, %v91
    %v96 = vpack.c.b16 %v92, %v92
    %v97 = vpack.c.b16 %v93, %v93
    %v98 = vpack.c.b16 %v94, %v94
    %v167 = vunpack.c.l.b16 %v18
    %v168 = vunpack.c.l.b16 %v19
    %v169 = vunpack.c.l.b16 %v20
    %v170 = vunpack.c.l.b16 %v21
    %v171 = vunpack.c.l.b16 %v22
    %v172 = vunpack.c.l.b16 %v23
    %v173 = vunpack.c.l.b16 %v24
    %v174 = vunpack.c.l.b16 %v25
    %v175 = vunpack.c.l.b16 %v26
    %v176 = vunpack.c.l.b16 %v27
    %v177 = vunpack.c.l.b16 %v28
    %v178 = vunpack.c.l.b16 %v29
    %v179 = vunpack.c.l.b16 %v30
    %v180 = vunpack.c.l.b16 %v31
    %v181 = vunpack.c.l.b16 %v32
    %v182 = vunpack.c.l.b16 %v33
    %v183 = vunpack.c.l.b16 %v34
    %v184 = vunpack.c.l.b16 %v35
    %v185 = vunpack.c.l.b16 %v36
    %v186 = vunpack.c.l.b16 %v37
    %v187 = vunpack.c.l.b16 %v38
    %v188 = vunpack.c.l.b16 %v39
    %v189 = vunpack.c.l.b16 %v40
    %v190 = vunpack.c.l.b16 %v41
    %v191 = vunpack.c.l.b16 %v42
    %v192 = vunpack.c.l.b16 %v43
    %v193 = vunpack.c.l.b16 %v44
    %v194 = vunpack.c.l.b16 %v45
    %v195 = vunpack.c.l.b16 %v46
    %v196 = vunpack.c.l.b16 %v47
    %v197 = vunpack.c.l.b16 %v48
    %v198 = vunpack.c.l.b16 %v49
    %v199 = vunpack.c.l.b16 %v50
    %v200 = vunpack.c.l.b16 %v51
    %v201 = vunpack.c.l.b16 %v52
    %v202 = vunpack.c.l.b16 %v53
    %v203 = vunpack.c.l.b16 %v54
    %v204 = vunpack.c.l.b16 %v55
    %v205 = vunpack.c.l.b16 %v56
    %v206 = vunpack.c.l.b16 %v57
    %v207 = vunpack.c.l.b16 %v58
    %v208 = vunpack.c.l.b16 %v59
    %v209 = vunpack.c.l.b16 %v60
    %v210 = vunpack.c.l.b16 %v61
    %v211 = vunpack.c.l.b16 %v62
    %v212 = vunpack.c.l.b16 %v63
    %v213 = vunpack.c.l.b16 %v64
    %v214 = vunpack.c.l.b16 %v65
    %v215 = vunpack.c.l.b16 %v66
    %v216 = vunpack.c.l.b16 %v67
    %v217 = vunpack.c.l.b16 %v68
    %v218 = vunpack.c.l.b16 %v69
    %v219 = vunpack.c.l.b16 %v70
    %v220 = vunpack.c.l.b16 %v71
    %v221 = vunpack.c.l.b16 %v72
    %v222 = vunpack.c.l.b16 %v73
    %v223 = vunpack.c.l.b16 %v74
    %v224 = vunpack.c.l.b16 %v75
    %v225 = vunpack.c.l.b16 %v76
    %v226 = vunpack.c.l.b16 %v77
    %v227 = vunpack.c.l.b16 %v78
    %v228 = vunpack.c.l.b16 %v79
    %v229 = vunpack.c.l.b16 %v80
    %v230 = vunpack.c.l.b16 %v81
    %v231 = vpack.c.b16 %v168, %v167
    %v232 = vpack.c.b16 %v170, %v169
    %v233 = vpack.c.b16 %v172, %v171
    %v234 = vpack.c.b16 %v174, %v173
    %v235 = vpack.c.b16 %v176, %v175
    %v236 = vpack.c.b16 %v178, %v177
    %v237 = vpack.c.b16 %v180, %v179
    %v238 = vpack.c.b16 %v182, %v181
    %v239 = vpack.c.b16 %v184, %v183
    %v240 = vpack.c.b16 %v186, %v185
    %v241 = vpack.c.b16 %v188, %v187
    %v242 = vpack.c.b16 %v190, %v189
    %v243 = vpack.c.b16 %v192, %v191
    %v244 = vpack.c.b16 %v194, %v193
    %v245 = vpack.c.b16 %v196, %v195
    %v246 = vpack.c.b16 %v198, %v197
    %v247 = vpack.c.b16 %v200, %v199
    %v248 = vpack.c.b16 %v202, %v201
    %v249 = vpack.c.b16 %v204, %v203
    %v250 = vpack.c.b16 %v206, %v205
    %v251 = vpack.c.b16 %v208, %v207
    %v252 = vpack.c.b16 %v210, %v209
    %v253 = vpack.c.b16 %v212, %v211
    %v254 = vpack.c.b16 %v214, %v213
    %v255 = vpack.c.b16 %v216, %v215
    %v256 = vpack.c.b16 %v218, %v217
    %v257 = vpack.c.b16 %v220, %v219
    %v258 = vpack.c.b16 %v222, %v221
    %v259 = vpack.c.b16 %v224, %v223
    %v260 = vpack.c.b16 %v226, %v225
    %v261 = vpack.c.b16 %v228, %v227
    %v262 = vpack.c.b16 %v230, %v229
    %295 = vmatprep.subr.bf16.mxu0 0
    %296 = vmatpush1.bf16.msra.mxu0 %v231
    %297 = vmatprep.subr.bf16.mxu0 0
    %298 = vmatpush1.bf16.msra.mxu0 %v232
    %299 = vmatprep.subr.bf16.mxu0 0
    %300 = vmatpush1.bf16.msra.mxu0 %v233
    %301 = vmatprep.subr.bf16.mxu0 0
    %302 = vmatpush1.bf16.msra.mxu0 %v234
    %303 = vmatprep.subr.bf16.mxu0 0
    %304 = vmatpush1.bf16.msra.mxu0 %v235
    %305 = vmatprep.subr.bf16.mxu0 0
    %306 = vmatpush1.bf16.msra.mxu0 %v236
    %307 = vmatprep.subr.bf16.mxu0 0
    %308 = vmatpush1.bf16.msra.mxu0 %v237
    %309 = vmatprep.subr.bf16.mxu0 0
    %310 = vmatpush1.bf16.msra.mxu0 %v238
    %311 = vmatprep.subr.bf16.mxu0 0
    %312 = vmatpush1.bf16.msra.mxu0 %v239
    %313 = vmatprep.subr.bf16.mxu0 0
    %314 = vmatpush1.bf16.msra.mxu0 %v240
    %315 = vmatprep.subr.bf16.mxu0 0
    %316 = vmatpush1.bf16.msra.mxu0 %v241
    %317 = vmatprep.subr.bf16.mxu0 0
    %318 = vmatpush1.bf16.msra.mxu0 %v242
    %319 = vmatprep.subr.bf16.mxu0 0
    %320 = vmatpush1.bf16.msra.mxu0 %v243
    %321 = vmatprep.subr.bf16.mxu0 0
    %322 = vmatpush1.bf16.msra.mxu0 %v244
    %323 = vmatprep.subr.bf16.mxu0 0
    %324 = vmatpush1.bf16.msra.mxu0 %v245
    %325 = vmatprep.subr.bf16.mxu0 0
    %326 = vmatpush1.bf16.msra.mxu0 %v246
    %327 = vmatprep.mubr.bf16.mxu0 %v96
    %328 = vmatmul.mubr.bf16.gmra.mrb[0].mxu0 %v95
    %v329 = vpop.f32.mrb[0].mxu0
    %v330 = vadd.f32 %v87, %v329
    %v331 = vpop.f32.mrb[0].mxu0
    %v332 = vpop.f32.mrb[0].mxu0
    %v333 = vpop.f32.mrb[0].mxu0
    %334 = vdwg.mxu0
    %335 = vmatprep.subr.bf16.mxu0 0
    %336 = vmatpush1.bf16.msra.mxu0 %v247
    %337 = vmatprep.subr.bf16.mxu0 0
    %338 = vmatpush1.bf16.msra.mxu0 %v248
    %339 = vmatprep.subr.bf16.mxu0 0
    %340 = vmatpush1.bf16.msra.mxu0 %v249
    %341 = vmatprep.subr.bf16.mxu0 0
    %342 = vmatpush1.bf16.msra.mxu0 %v250
    %343 = vmatprep.subr.bf16.mxu0 0
    %344 = vmatpush1.bf16.msra.mxu0 %v251
    %345 = vmatprep.subr.bf16.mxu0 0
    %346 = vmatpush1.bf16.msra.mxu0 %v252
    %347 = vmatprep.subr.bf16.mxu0 0
    %348 = vmatpush1.bf16.msra.mxu0 %v253
    %349 = vmatprep.subr.bf16.mxu0 0
    %350 = vmatpush1.bf16.msra.mxu0 %v254
    %351 = vmatprep.subr.bf16.mxu0 0
    %352 = vmatpush1.bf16.msra.mxu0 %v255
    %353 = vmatprep.subr.bf16.mxu0 0
    %354 = vmatpush1.bf16.msra.mxu0 %v256
    %355 = vmatprep.subr.bf16.mxu0 0
    %356 = vmatpush1.bf16.msra.mxu0 %v257
    %357 = vmatprep.subr.bf16.mxu0 0
    %358 = vmatpush1.bf16.msra.mxu0 %v258
    %359 = vmatprep.subr.bf16.mxu0 0
    %360 = vmatpush1.bf16.msra.mxu0 %v259
    %361 = vmatprep.subr.bf16.mxu0 0
    %362 = vmatpush1.bf16.msra.mxu0 %v260
    %363 = vmatprep.subr.bf16.mxu0 0
    %364 = vmatpush1.bf16.msra.mxu0 %v261
    %365 = vmatprep.subr.bf16.mxu0 0
    %366 = vmatpush1.bf16.msra.mxu0 %v262
    %367 = vmatprep.mubr.bf16.mxu0 %v98
    %368 = vmatmul.mubr.bf16.gmra.mrb[0].mxu0 %v97
    %v369 = vpop.f32.mrb[0].mxu0
    %v370 = vadd.f32 %v330, %v369
    %v371 = vpop.f32.mrb[0].mxu0
    %v372 = vpop.f32.mrb[0].mxu0
    %v373 = vpop.f32.mrb[0].mxu0
    %374 = vdwg.mxu0
    %375 = vst [vmem:[#allocation2] sm:$0xff] %v370
    // Predicated region
    $region14: #{_forward_impl.1} parent=1 // pred_check
      _
    $region15: #{_forward_impl.1} parent=1 // pred_check_branch
      %377 = sbr.rel (0) target = $region17
    $region16: #{_forward_impl.1} parent=1 // pred_region
      %s379 = ssub.s32 128, 128
      %380 = vsyncadd [#allocation3], %s379
      %s382 = sshll.u32 [#allocation2], 4
      %s383 = int_to_ptr.vmem [resolvable:$true] %s382
      %385 = dma.vmem_to_hbm [thread:$0]  %s383, 128, %s3, [#allocation3]
    $region17: #{_forward_impl.1} parent=1 // pred_fallthru
      _
    // Predicated region
    $region18: #{_forward_impl.1} parent=1 // pred_check
      _
    $region19: #{_forward_impl.1} parent=1 // pred_check_branch
      %387 = sbr.rel (0) target = $region21
    $region20: #{_forward_impl.1} parent=1 // pred_region
      %388 = dma.done [#allocation3], 128
    $region21: #{_forward_impl.1} parent=1 // pred_fallthru
      _
    %389 = vsyncpa [#allocation3], 1

// kernel: _forward_impl.1
$region0: #{_forward_impl.1}
  #allocation0 [shape = 'u32[]', space=smem, size = 0x4, offset = 0x4, fixed_abs, tag = 'smem constant byte address 0x4 - core index']
  #allocation1 [shape = 'u32[144,128]{1,0:T(1,128)}', space=vmem, size = 0x12000, scoped, tag = 'internal scratch']
  %s0 = inlined_call_operand.vmem [shape: bf16[8,512], index: 0, kind: input, shape index: {}]
  %s1 = inlined_call_operand.vmem [shape: bf16[512,128], index: 1, kind: input, shape index: {}]
  %s2 = inlined_call_operand.vmem [shape: f32[1,128], index: 2, kind: input, shape index: {}]
  %s3 = inlined_call_operand.hbm [shape: f32[8,128], index: 3, kind: output, shape index: {}]
  %s4 = sld [smem:[#allocation0]]
  $region22: #{_forward_impl.1} parent=0
    _
  %s6 = ssub.s32 1, %s4
  %s7 = scalar_select 0, %s6, %s4
  $region1: #{_forward_impl.1} parent=0
    #allocation2 [shape = 'u8[4096]{0}', space=vmem, size = 0x1000, scoped, tag = 'output window, operand 0, single buffered']
    #allocation3 [shape = 's32[1]{0}', space=sflag, size = 0x4, scoped, tag = 'scoped memory for _forward_impl.1']
    %8 = vsyncpa [#allocation3], 0
    // Predicated region
    $region2: #{_forward_impl.1} parent=1 // pred_check
      _
    $region3: #{_forward_impl.1} parent=1 // pred_check_branch
      %10 = sbr.rel (0) target = $region5
    $region4: #{_forward_impl.1} parent=1 // pred_region
      _
    $region5: #{_forward_impl.1} parent=1 // pred_fallthru
      _
    // Predicated region
    $region6: #{_forward_impl.1} parent=1 // pred_check
      _
    $region7: #{_forward_impl.1} parent=1 // pred_check_branch
      %12 = sbr.rel (0) target = $region9
    $region8: #{_forward_impl.1} parent=1 // pred_region
      _
    $region9: #{_forward_impl.1} parent=1 // pred_fallthru
      _
    // Predicated region
    $region10: #{_forward_impl.1} parent=1 // pred_check
      _
    $region11: #{_forward_impl.1} parent=1 // pred_check_branch
      %14 = sbr.rel (0) target = $region13
    $region12: #{_forward_impl.1} parent=1 // pred_region
      _
    $region13: #{_forward_impl.1} parent=1 // pred_fallthru
      _
    %v16 = vld [vmem:[%s0] sm:$0xff]
    %v17 = vld [vmem:[%s0 + $0x8] sm:$0xff]
    %v18 = vld [vmem:[%s1] sm:$0xf]
    %v19 = vld [vmem:[%s1 + $0x4] sm:$0xf]
    %v20 = vld [vmem:[%s1 + $0x8] sm:$0xf]
    %v21 = vld [vmem:[%s1 + $0xc] sm:$0xf]
    %v22 = vld [vmem:[%s1 + $0x10] sm:$0xf]
    %v23 = vld [vmem:[%s1 + $0x14] sm:$0xf]
    %v24 = vld [vmem:[%s1 + $0x18] sm:$0xf]
    %v25 = vld [vmem:[%s1 + $0x1c] sm:$0xf]
    %v26 = vld [vmem:[%s1 + $0x20] sm:$0xf]
    %v27 = vld [vmem:[%s1 + $0x24] sm:$0xf]
    %v28 = vld [vmem:[%s1 + $0x28] sm:$0xf]
    %v29 = vld [vmem:[%s1 + $0x2c] sm:$0xf]
    %v30 = vld [vmem:[%s1 + $0x30] sm:$0xf]
    %v31 = vld [vmem:[%s1 + $0x34] sm:$0xf]
    %v32 = vld [vmem:[%s1 + $0x38] sm:$0xf]
    %v33 = vld [vmem:[%s1 + $0x3c] sm:$0xf]
    %v34 = vld [vmem:[%s1 + $0x40] sm:$0xf]
    %v35 = vld [vmem:[%s1 + $0x44] sm:$0xf]
    %v36 = vld [vmem:[%s1 + $0x48] sm:$0xf]
    %v37 = vld [vmem:[%s1 + $0x4c] sm:$0xf]
    %v38 = vld [vmem:[%s1 + $0x50] sm:$0xf]
    %v39 = vld [vmem:[%s1 + $0x54] sm:$0xf]
    %v40 = vld [vmem:[%s1 + $0x58] sm:$0xf]
    %v41 = vld [vmem:[%s1 + $0x5c] sm:$0xf]
    %v42 = vld [vmem:[%s1 + $0x60] sm:$0xf]
    %v43 = vld [vmem:[%s1 + $0x64] sm:$0xf]
    %v44 = vld [vmem:[%s1 + $0x68] sm:$0xf]
    %v45 = vld [vmem:[%s1 + $0x6c] sm:$0xf]
    %v46 = vld [vmem:[%s1 + $0x70] sm:$0xf]
    %v47 = vld [vmem:[%s1 + $0x74] sm:$0xf]
    %v48 = vld [vmem:[%s1 + $0x78] sm:$0xf]
    %v49 = vld [vmem:[%s1 + $0x7c] sm:$0xf]
    %v50 = vld [vmem:[%s1 + $0x80] sm:$0xf]
    %v51 = vld [vmem:[%s1 + $0x84] sm:$0xf]
    %v52 = vld [vmem:[%s1 + $0x88] sm:$0xf]
    %v53 = vld [vmem:[%s1 + $0x8c] sm:$0xf]
    %v54 = vld [vmem:[%s1 + $0x90] sm:$0xf]
    %v55 = vld [vmem:[%s1 + $0x94] sm:$0xf]
    %v56 = vld [vmem:[%s1 + $0x98] sm:$0xf]
    %v57 = vld [vmem:[%s1 + $0x9c] sm:$0xf]
    %v58 = vld [vmem:[%s1 + $0xa0] sm:$0xf]
    %v59 = vld [vmem:[%s1 + $0xa4] sm:$0xf]
    %v60 = vld [vmem:[%s1 + $0xa8] sm:$0xf]
    %v61 = vld [vmem:[%s1 + $0xac] sm:$0xf]
    %v62 = vld [vmem:[%s1 + $0xb0] sm:$0xf]
    %v63 = vld [vmem:[%s1 + $0xb4] sm:$0xf]
    %v64 = vld [vmem:[%s1 + $0xb8] sm:$0xf]
    %v65 = vld [vmem:[%s1 + $0xbc] sm:$0xf]
    %v66 = vld [vmem:[%s1 + $0xc0] sm:$0xf]
    %v67 = vld [vmem:[%s1 + $0xc4] sm:$0xf]
    %v68 = vld [vmem:[%s1 + $0xc8] sm:$0xf]
    %v69 = vld [vmem:[%s1 + $0xcc] sm:$0xf]
    %v70 = vld [vmem:[%s1 + $0xd0] sm:$0xf]
    %v71 = vld [vmem:[%s1 + $0xd4] sm:$0xf]
    %v72 = vld [vmem:[%s1 + $0xd8] sm:$0xf]
    %v73 = vld [vmem:[%s1 + $0xdc] sm:$0xf]
    %v74 = vld [vmem:[%s1 + $0xe0] sm:$0xf]
    %v75 = vld [vmem:[%s1 + $0xe4] sm:$0xf]
    %v76 = vld [vmem:[%s1 + $0xe8] sm:$0xf]
    %v77 = vld [vmem:[%s1 + $0xec] sm:$0xf]
    %v78 = vld [vmem:[%s1 + $0xf0] sm:$0xf]
    %v79 = vld [vmem:[%s1 + $0xf4] sm:$0xf]
    %v80 = vld [vmem:[%s1 + $0xf8] sm:$0xf]
    %v81 = vld [vmem:[%s1 + $0xfc] sm:$0xf]
    %v82 = vld [vmem:[%s2] sm:$0x1]
    %v84 = vlaneseq
    %v85 = vshrl.u32 %v84, 7
    %v86 = vsub.s32 0, %v85
    %v87 = vrot.slane %v82, %v86
    %v91 = vunpack.c.l.b16 %v16
    %v92 = vunpack.c.h.b16 %v16
    %v93 = vunpack.c.l.b16 %v17
    %v94 = vunpack.c.h.b16 %v17
    %v95 = vpack.c.b16 %v91, %v91
    %v96 = vpack.c.b16 %v92, %v92
    %v97 = vpack.c.b16 %v93, %v93
    %v98 = vpack.c.b16 %v94, %v94
    %v167 = vunpack.c.l.b16 %v18
    %v168 = vunpack.c.l.b16 %v19
    %v169 = vunpack.c.l.b16 %v20
    %v170 = vunpack.c.l.b16 %v21
    %v171 = vunpack.c.l.b16 %v22
    %v172 = vunpack.c.l.b16 %v23
    %v173 = vunpack.c.l.b16 %v24
    %v174 = vunpack.c.l.b16 %v25
    %v175 = vunpack.c.l.b16 %v26
    %v176 = vunpack.c.l.b16 %v27
    %v177 = vunpack.c.l.b16 %v28
    %v178 = vunpack.c.l.b16 %v29
    %v179 = vunpack.c.l.b16 %v30
    %v180 = vunpack.c.l.b16 %v31
    %v181 = vunpack.c.l.b16 %v32
    %v182 = vunpack.c.l.b16 %v33
    %v183 = vunpack.c.l.b16 %v34
    %v184 = vunpack.c.l.b16 %v35
    %v185 = vunpack.c.l.b16 %v36
    %v186 = vunpack.c.l.b16 %v37
    %v187 = vunpack.c.l.b16 %v38
    %v188 = vunpack.c.l.b16 %v39
    %v189 = vunpack.c.l.b16 %v40
    %v190 = vunpack.c.l.b16 %v41
    %v191 = vunpack.c.l.b16 %v42
    %v192 = vunpack.c.l.b16 %v43
    %v193 = vunpack.c.l.b16 %v44
    %v194 = vunpack.c.l.b16 %v45
    %v195 = vunpack.c.l.b16 %v46
    %v196 = vunpack.c.l.b16 %v47
    %v197 = vunpack.c.l.b16 %v48
    %v198 = vunpack.c.l.b16 %v49
    %v199 = vunpack.c.l.b16 %v50
    %v200 = vunpack.c.l.b16 %v51
    %v201 = vunpack.c.l.b16 %v52
    %v202 = vunpack.c.l.b16 %v53
    %v203 = vunpack.c.l.b16 %v54
    %v204 = vunpack.c.l.b16 %v55
    %v205 = vunpack.c.l.b16 %v56
    %v206 = vunpack.c.l.b16 %v57
    %v207 = vunpack.c.l.b16 %v58
    %v208 = vunpack.c.l.b16 %v59
    %v209 = vunpack.c.l.b16 %v60
    %v210 = vunpack.c.l.b16 %v61
    %v211 = vunpack.c.l.b16 %v62
    %v212 = vunpack.c.l.b16 %v63
    %v213 = vunpack.c.l.b16 %v64
    %v214 = vunpack.c.l.b16 %v65
    %v215 = vunpack.c.l.b16 %v66
    %v216 = vunpack.c.l.b16 %v67
    %v217 = vunpack.c.l.b16 %v68
    %v218 = vunpack.c.l.b16 %v69
    %v219 = vunpack.c.l.b16 %v70
    %v220 = vunpack.c.l.b16 %v71
    %v221 = vunpack.c.l.b16 %v72
    %v222 = vunpack.c.l.b16 %v73
    %v223 = vunpack.c.l.b16 %v74
    %v224 = vunpack.c.l.b16 %v75
    %v225 = vunpack.c.l.b16 %v76
    %v226 = vunpack.c.l.b16 %v77
    %v227 = vunpack.c.l.b16 %v78
    %v228 = vunpack.c.l.b16 %v79
    %v229 = vunpack.c.l.b16 %v80
    %v230 = vunpack.c.l.b16 %v81
    %v231 = vpack.c.b16 %v168, %v167
    %v232 = vpack.c.b16 %v170, %v169
    %v233 = vpack.c.b16 %v172, %v171
    %v234 = vpack.c.b16 %v174, %v173
    %v235 = vpack.c.b16 %v176, %v175
    %v236 = vpack.c.b16 %v178, %v177
    %v237 = vpack.c.b16 %v180, %v179
    %v238 = vpack.c.b16 %v182, %v181
    %v239 = vpack.c.b16 %v184, %v183
    %v240 = vpack.c.b16 %v186, %v185
    %v241 = vpack.c.b16 %v188, %v187
    %v242 = vpack.c.b16 %v190, %v189
    %v243 = vpack.c.b16 %v192, %v191
    %v244 = vpack.c.b16 %v194, %v193
    %v245 = vpack.c.b16 %v196, %v195
    %v246 = vpack.c.b16 %v198, %v197
    %v247 = vpack.c.b16 %v200, %v199
    %v248 = vpack.c.b16 %v202, %v201
    %v249 = vpack.c.b16 %v204, %v203
    %v250 = vpack.c.b16 %v206, %v205
    %v251 = vpack.c.b16 %v208, %v207
    %v252 = vpack.c.b16 %v210, %v209
    %v253 = vpack.c.b16 %v212, %v211
    %v254 = vpack.c.b16 %v214, %v213
    %v255 = vpack.c.b16 %v216, %v215
    %v256 = vpack.c.b16 %v218, %v217
    %v257 = vpack.c.b16 %v220, %v219
    %v258 = vpack.c.b16 %v222, %v221
    %v259 = vpack.c.b16 %v224, %v223
    %v260 = vpack.c.b16 %v226, %v225
    %v261 = vpack.c.b16 %v228, %v227
    %v262 = vpack.c.b16 %v230, %v229
    %295 = vmatprep.subr.bf16.mxu0 0
    %296 = vmatpush1.bf16.msra.mxu0 %v231
    %297 = vmatprep.subr.bf16.mxu0 0
    %298 = vmatpush1.bf16.msra.mxu0 %v232
    %299 = vmatprep.subr.bf16.mxu0 0
    %300 = vmatpush1.bf16.msra.mxu0 %v233
    %301 = vmatprep.subr.bf16.mxu0 0
    %302 = vmatpush1.bf16.msra.mxu0 %v234
    %303 = vmatprep.subr.bf16.mxu0 0
    %304 = vmatpush1.bf16.msra.mxu0 %v235
    %305 = vmatprep.subr.bf16.mxu0 0
    %306 = vmatpush1.bf16.msra.mxu0 %v236
    %307 = vmatprep.subr.bf16.mxu0 0
    %308 = vmatpush1.bf16.msra.mxu0 %v237
    %309 = vmatprep.subr.bf16.mxu0 0
    %310 = vmatpush1.bf16.msra.mxu0 %v238
    %311 = vmatprep.subr.bf16.mxu0 0
    %312 = vmatpush1.bf16.msra.mxu0 %v239
    %313 = vmatprep.subr.bf16.mxu0 0
    %314 = vmatpush1.bf16.msra.mxu0 %v240
    %315 = vmatprep.subr.bf16.mxu0 0
    %316 = vmatpush1.bf16.msra.mxu0 %v241
    %317 = vmatprep.subr.bf16.mxu0 0
    %318 = vmatpush1.bf16.msra.mxu0 %v242
    %319 = vmatprep.subr.bf16.mxu0 0
    %320 = vmatpush1.bf16.msra.mxu0 %v243
    %321 = vmatprep.subr.bf16.mxu0 0
    %322 = vmatpush1.bf16.msra.mxu0 %v244
    %323 = vmatprep.subr.bf16.mxu0 0
    %324 = vmatpush1.bf16.msra.mxu0 %v245
    %325 = vmatprep.subr.bf16.mxu0 0
    %326 = vmatpush1.bf16.msra.mxu0 %v246
    %327 = vmatprep.mubr.bf16.mxu0 %v96
    %328 = vmatmul.mubr.bf16.gmra.mrb[0].mxu0 %v95
    %v329 = vpop.f32.mrb[0].mxu0
    %v330 = vadd.f32 %v87, %v329
    %v331 = vpop.f32.mrb[0].mxu0
    %v332 = vpop.f32.mrb[0].mxu0
    %v333 = vpop.f32.mrb[0].mxu0
    %334 = vdwg.mxu0
    %335 = vmatprep.subr.bf16.mxu0 0
    %336 = vmatpush1.bf16.msra.mxu0 %v247
    %337 = vmatprep.subr.bf16.mxu0 0
    %338 = vmatpush1.bf16.msra.mxu0 %v248
    %339 = vmatprep.subr.bf16.mxu0 0
    %340 = vmatpush1.bf16.msra.mxu0 %v249
    %341 = vmatprep.subr.bf16.mxu0 0
    %342 = vmatpush1.bf16.msra.mxu0 %v250
    %343 = vmatprep.subr.bf16.mxu0 0
    %344 = vmatpush1.bf16.msra.mxu0 %v251
    %345 = vmatprep.subr.bf16.mxu0 0
    %346 = vmatpush1.bf16.msra.mxu0 %v252
    %347 = vmatprep.subr.bf16.mxu0 0
    %348 = vmatpush1.bf16.msra.mxu0 %v253
    %349 = vmatprep.subr.bf16.mxu0 0
    %350 = vmatpush1.bf16.msra.mxu0 %v254
    %351 = vmatprep.subr.bf16.mxu0 0
    %352 = vmatpush1.bf16.msra.mxu0 %v255
    %353 = vmatprep.subr.bf16.mxu0 0
    %354 = vmatpush1.bf16.msra.mxu0 %v256
    %355 = vmatprep.subr.bf16.mxu0 0
    %356 = vmatpush1.bf16.msra.mxu0 %v257
    %357 = vmatprep.subr.bf16.mxu0 0
    %358 = vmatpush1.bf16.msra.mxu0 %v258
    %359 = vmatprep.subr.bf16.mxu0 0
    %360 = vmatpush1.bf16.msra.mxu0 %v259
    %361 = vmatprep.subr.bf16.mxu0 0
    %362 = vmatpush1.bf16.msra.mxu0 %v260
    %363 = vmatprep.subr.bf16.mxu0 0
    %364 = vmatpush1.bf16.msra.mxu0 %v261
    %365 = vmatprep.subr.bf16.mxu0 0
    %366 = vmatpush1.bf16.msra.mxu0 %v262
    %367 = vmatprep.mubr.bf16.mxu0 %v98
    %368 = vmatmul.mubr.bf16.gmra.mrb[0].mxu0 %v97
    %v369 = vpop.f32.mrb[0].mxu0
    %v370 = vadd.f32 %v330, %v369
    %v371 = vpop.f32.mrb[0].mxu0
    %v372 = vpop.f32.mrb[0].mxu0
    %v373 = vpop.f32.mrb[0].mxu0
    %374 = vdwg.mxu0
    %375 = vst [vmem:[#allocation2] sm:$0xff] %v370
    // Predicated region
    $region14: #{_forward_impl.1} parent=1 // pred_check
      _
    $region15: #{_forward_impl.1} parent=1 // pred_check_branch
      %377 = sbr.rel (0) target = $region17
    $region16: #{_forward_impl.1} parent=1 // pred_region
      %s379 = ssub.s32 128, 128
      %380 = vsyncadd [#allocation3], %s379
      %s382 = sshll.u32 [#allocation2], 4
      %s383 = int_to_ptr.vmem [resolvable:$true] %s382
      %385 = dma.vmem_to_hbm [thread:$0]  %s383, 128, %s3, [#allocation3]
    $region17: #{_forward_impl.1} parent=1 // pred_fallthru
      _
    // Predicated region
    $region18: #{_forward_impl.1} parent=1 // pred_check
      _
    $region19: #{_forward_impl.1} parent=1 // pred_check_branch
      %387 = sbr.rel (0) target = $region21
    $region20: #{_forward_impl.1} parent=1 // pred_region
      %388 = dma.done [#allocation3], 128
    $region21: #{_forward_impl.1} parent=1 // pred_fallthru
      _
    %389 = vsyncpa [#allocation3], 1

</llo_original>
